<compile_context>
chip_gen: v6e
topology: v6e:2x2x1
jax: 0.10.0
libtpu: 0.0.40
codegen_flags: <defaults>
</compile_context>

<pallas_src>
import functools

import jax
import jax.numpy as jnp
from jax import lax
from jax.experimental import pallas as pl
from jax.experimental.pallas import tpu as pltpu

EPS = 1e-5
LANES = 128
STRIP_ROWS = 8           # one (8, 128) f32 vreg per strip per component


def _sphere_trace_kernel(o_ref, d_ref, c_ref, r_ref, w_ref, b_ref, color_ref,
                         *, max_iters):
    # o_ref / d_ref / color_ref : (3, rows_per_block, LANES) VMEM blocks
    # c_ref (3,), r_ref (1,), w_ref (9,), b_ref (3,) : SMEM scalars
    rows = o_ref.shape[1]
    n_strips = rows // STRIP_ROWS
    shape = (STRIP_ROWS, LANES)

    # Scalar -> vreg splats hoisted ONCE per grid step (outside the strip
    # loop); JAX does not CSE broadcast_in_dim so emitting these inside the
    # loop would cost 18 splats per strip.
    cx = jnp.full(shape, c_ref[0], jnp.float32)
    cy = jnp.full(shape, c_ref[1], jnp.float32)
    cz = jnp.full(shape, c_ref[2], jnp.float32)
    rad = jnp.full(shape, r_ref[0], jnp.float32)
    eps_v = jnp.full(shape, EPS, jnp.float32)
    zero = jnp.zeros(shape, jnp.float32)
    half = jnp.full(shape, 0.5, jnp.float32)
    # W is row-major flattened (3x3); consumed column-wise to match p @ W.
    w00 = jnp.full(shape, w_ref[0], jnp.float32)
    w01 = jnp.full(shape, w_ref[1], jnp.float32)
    w02 = jnp.full(shape, w_ref[2], jnp.float32)
    w10 = jnp.full(shape, w_ref[3], jnp.float32)
    w11 = jnp.full(shape, w_ref[4], jnp.float32)
    w12 = jnp.full(shape, w_ref[5], jnp.float32)
    w20 = jnp.full(shape, w_ref[6], jnp.float32)
    w21 = jnp.full(shape, w_ref[7], jnp.float32)
    w22 = jnp.full(shape, w_ref[8], jnp.float32)
    b0 = jnp.full(shape, b_ref[0], jnp.float32)
    b1 = jnp.full(shape, b_ref[1], jnp.float32)
    b2 = jnp.full(shape, b_ref[2], jnp.float32)

    def sdf(qx, qy, qz):
        # centered coordinates: no per-iteration (p - center) subtraction
        return jnp.sqrt(qx * qx + qy * qy + qz * qz) - rad

    def sigmoid(x):
        # tanh form: transcendental on EUP (free slot), 3 cheap VALU ops.
        return half * jnp.tanh(half * x) + half

    @pl.loop(0, n_strips)
    def _(t):
        r0 = pl.multiple_of(t * STRIP_ROWS, STRIP_ROWS)
        sl = pl.ds(r0, STRIP_ROWS)

        dx = d_ref[0, sl, :]
        dy = d_ref[1, sl, :]
        dz = d_ref[2, sl, :]
        # trace in centered coordinates q = p - center
        qx = o_ref[0, sl, :] - cx
        qy = o_ref[1, sl, :] - cy
        qz = o_ref[2, sl, :] - cz

        # Reference semantics: p = o; repeat max_iters: p <- sdf(p)*d + p;
        # then mask = sdf(p) < eps.  Carrying s = sdf(q) keeps the total sqrt
        # count at max_iters + 1 with no redundant post-loop recompute.
        def body(i, carry):
            qx, qy, qz, s = carry
            qx = s * dx + qx
            qy = s * dy + qy
            qz = s * dz + qz
            return qx, qy, qz, sdf(qx, qy, qz)

        init = (qx, qy, qz, sdf(qx, qy, qz))
        qx, qy, qz, s = lax.fori_loop(0, max_iters, body, init, unroll=True)

        mask = s < eps_v  # (8, LANES); same per-ray mask for all 3 channels

        # get_color(p) = sigmoid(p @ W + b); add center back once.
        px = qx + cx
        py = qy + cy
        pz = qz + cz
        c0 = sigmoid(px * w00 + py * w10 + pz * w20 + b0)
        c1 = sigmoid(px * w01 + py * w11 + pz * w21 + b1)
        c2 = sigmoid(px * w02 + py * w12 + pz * w22 + b2)

        color_ref[0, sl, :] = jnp.where(mask, c0, zero)
        color_ref[1, sl, :] = jnp.where(mask, c1, zero)
        color_ref[2, sl, :] = jnp.where(mask, c2, zero)


def _pick_rows_per_block(rows, target_grid=4, max_rows_per_block=1024):
    """Largest divisor of `rows` (multiple of 8, <= cap) keeping grid >= target_grid.

    >= 4 parallel grid steps keeps both v7x TensorCores busy; on single-TC
    v5e/v6e the resulting fewer/bigger steps minimize per-step overhead.
    """
    best = STRIP_ROWS
    rpb = STRIP_ROWS
    cap = min(rows, max_rows_per_block)
    while rpb <= cap:
        if rows % rpb == 0 and rows // rpb >= target_grid:
            best = rpb
        rpb += STRIP_ROWS
    return best


def sphere_trace_render_soa(o_soa, d_soa, center, radius, w_color, b_color,
                            *, max_iters=16, rows_per_block=None):
    """SoA end-to-end path.

    o_soa / d_soa: (3, rows, 128) float32 component planes (rays on the lane
    axis).  Returns colors in the same (3, rows, 128) layout — no per-call
    AoS<->SoA transposes / extra HBM traffic.
    """
    three, rows, lanes = o_soa.shape
    assert three == 3 and lanes == LANES and rows % STRIP_ROWS == 0
    if rows_per_block is None:
        rows_per_block = _pick_rows_per_block(rows)
    assert rows % rows_per_block == 0 and rows_per_block % STRIP_ROWS == 0

    kernel = functools.partial(_sphere_trace_kernel, max_iters=max_iters)
    smem_spec = pl.BlockSpec(memory_space=pltpu.MemorySpace.SMEM)
    block = (3, rows_per_block, LANES)

    return pl.pallas_call(
        kernel,
        out_shape=jax.ShapeDtypeStruct((3, rows, LANES), jnp.float32),
        grid_spec=pltpu.PrefetchScalarGridSpec(
            num_scalar_prefetch=0,
            grid=(rows // rows_per_block,),
            in_specs=[
                pl.BlockSpec(block, lambda i: (0, i, 0)),   # origins (SoA)
                pl.BlockSpec(block, lambda i: (0, i, 0)),   # directions (SoA)
                smem_spec,                                  # center   (3,)
                smem_spec,                                  # radius   (1,)
                smem_spec,                                  # W_color  (9,)
                smem_spec,                                  # b_color  (3,)
            ],
            out_specs=pl.BlockSpec(block, lambda i: (0, i, 0)),
        ),
        compiler_params=pltpu.CompilerParams(
            dimension_semantics=("parallel",)),
    )(o_soa, d_soa,
      center.reshape(3), radius.reshape(1),
      w_color.reshape(9), b_color.reshape(3))


def sphere_trace_render(origins, directions, center, radius, w_color, b_color,
                        *, max_iters=16, rows_per_block=None):
    """(N, 3) AoS convenience wrapper (pads N to a multiple of 1024)."""
    n = origins.shape[0]
    pad = (-n) % (STRIP_ROWS * LANES)
    if pad:
        origins = jnp.concatenate(
            [origins, jnp.zeros((pad, 3), origins.dtype)], axis=0)
        directions = jnp.concatenate(
            [directions, jnp.zeros((pad, 3), directions.dtype)], axis=0)
    n_total = n + pad
    rows = n_total // LANES

    o_soa = origins.T.reshape(3, rows, LANES)
    d_soa = directions.T.reshape(3, rows, LANES)

    out = sphere_trace_render_soa(o_soa, d_soa, center, radius, w_color,
                                  b_color, max_iters=max_iters,
                                  rows_per_block=rows_per_block)
    return out.reshape(3, n_total)[:, :n].T


def _reference(origins, directions, center, radius, w_color, b_color,
               *, max_iters):
    def sdf(p):
        diff = p - center
        return jnp.sqrt((diff * diff).sum(-1, keepdims=True)) - radius

    p = origins
    s = sdf(p)
    for _ in range(max_iters):
        p = s * directions + p
        s = sdf(p)
    mask = s < EPS
    col = jax.nn.sigmoid(p @ w_color + b_color)
    return jnp.where(mask, col, jnp.zeros_like(col))


if __name__ == "__main__":
    key = jax.random.PRNGKey(0)
    k1, k2, k3, k4 = jax.random.split(key, 4)

    # 16384 rays -> SoA planes (3, 128, 128); auto-tiling picks
    # rows_per_block = 32 -> grid of 4 "parallel" steps x 4 strips each.
    n_rays, max_iters = 16384, 16

    origins = (jnp.tile(jnp.array([[0.0, 0.0, -3.0]], jnp.float32), (n_rays, 1))
               + 0.05 * jax.random.normal(k1, (n_rays, 3), jnp.float32))
    directions = (jnp.array([[0.0, 0.0, 1.0]], jnp.float32)
                  + 0.3 * jax.random.normal(k2, (n_rays, 3), jnp.float32))
    directions = directions / jnp.linalg.norm(directions, axis=-1, keepdims=True)

    # deterministic "implicit_fn" parameters
    center = jnp.array([[0.1, -0.2, 0.3]], jnp.float32)
    radius = jnp.array([[1.0]], jnp.float32)
    w_color = jax.random.normal(k3, (3, 3), jnp.float32)
    b_color = jax.random.normal(k4, (1, 3), jnp.float32)

    # --- SoA end-to-end path (no per-call AoS<->SoA transposes) ---
    rows = n_rays // LANES
    o_soa = origins.T.reshape(3, rows, LANES)
    d_soa = directions.T.reshape(3, rows, LANES)
    color_soa = sphere_trace_render_soa(o_soa, d_soa, center, radius,
                                        w_color, b_color, max_iters=max_iters)
    color_soa = jax.block_until_ready(color_soa)
    color = color_soa.reshape(3, n_rays).T   # only for the correctness check

    ref = _reference(origins, directions, center, radius, w_color, b_color,
                     max_iters=max_iters)
    assert color.shape == (n_rays, 3) and color.dtype == jnp.float32
    assert jnp.allclose(color, ref, atol=1e-4, rtol=1e-4), "SoA mismatch vs reference"

    # --- AoS wrapper + padding path (ray count not a multiple of 1024) ---
    n_small = 1000
    color_small = sphere_trace_render(origins[:n_small], directions[:n_small],
                                      center, radius, w_color, b_color,
                                      max_iters=max_iters)
    color_small = jax.block_until_ready(color_small)
    assert color_small.shape == (n_small, 3)
    assert jnp.allclose(color_small, ref[:n_small], atol=1e-4, rtol=1e-4), \
        "AoS/padded mismatch vs reference"

    print("KERNEL_OK")
</pallas_src>

<mosaic_0001>
module attributes {stable_mosaic.version = 11 : i64} {
  func.func @_sphere_trace_kernel(%arg0: i32, %arg1: memref<3x32x128xf32, #tpu.memory_space<vmem>>, %arg2: memref<3x32x128xf32, #tpu.memory_space<vmem>>, %arg3: memref<3xf32, #tpu.memory_space<smem>>, %arg4: memref<1xf32, #tpu.memory_space<smem>>, %arg5: memref<9xf32, #tpu.memory_space<smem>>, %arg6: memref<3xf32, #tpu.memory_space<smem>>, %arg7: memref<3x32x128xf32, #tpu.memory_space<vmem>>) attributes {dimension_semantics = [#tpu.dimension_semantics<parallel>], iteration_bounds = array<i64: 4>, scalar_prefetch = 0 : i64, scratch_operands = 0 : i64, tpu.core_type = #tpu.core_type<tc>, window_params = [{transform_indices = @transform_0, window_bounds = array<i64: 3, 32, 128>}, {transform_indices = @transform_1, window_bounds = array<i64: 3, 32, 128>}, {transform_indices = @transform_2, window_bounds = array<i64: 3>}, {transform_indices = @transform_3, window_bounds = array<i64: 1>}, {transform_indices = @transform_4, window_bounds = array<i64: 9>}, {transform_indices = @transform_5, window_bounds = array<i64: 3>}, {transform_indices = @transform_6, window_bounds = array<i64: 3, 32, 128>}]} {
    %c0 = arith.constant 0 : index
    %0 = memref.load %arg3[%c0] : memref<3xf32, #tpu.memory_space<smem>>
    %1 = vector.broadcast %0 : f32 to vector<8x128xf32>
    %c1 = arith.constant 1 : index
    %2 = memref.load %arg3[%c1] : memref<3xf32, #tpu.memory_space<smem>>
    %3 = vector.broadcast %2 : f32 to vector<8x128xf32>
    %c2 = arith.constant 2 : index
    %4 = memref.load %arg3[%c2] : memref<3xf32, #tpu.memory_space<smem>>
    %5 = vector.broadcast %4 : f32 to vector<8x128xf32>
    %c0_0 = arith.constant 0 : index
    %6 = memref.load %arg4[%c0_0] : memref<1xf32, #tpu.memory_space<smem>>
    %7 = vector.broadcast %6 : f32 to vector<8x128xf32>
    %cst = arith.constant 9.99999974E-6 : f32
    %8 = vector.broadcast %cst : f32 to vector<8x128xf32>
    %cst_1 = arith.constant 0.000000e+00 : f32
    %9 = vector.broadcast %cst_1 : f32 to vector<8x128xf32>
    %cst_2 = arith.constant 5.000000e-01 : f32
    %10 = vector.broadcast %cst_2 : f32 to vector<8x128xf32>
    %c0_3 = arith.constant 0 : index
    %11 = memref.load %arg5[%c0_3] : memref<9xf32, #tpu.memory_space<smem>>
    %12 = vector.broadcast %11 : f32 to vector<8x128xf32>
    %c1_4 = arith.constant 1 : index
    %13 = memref.load %arg5[%c1_4] : memref<9xf32, #tpu.memory_space<smem>>
    %14 = vector.broadcast %13 : f32 to vector<8x128xf32>
    %c2_5 = arith.constant 2 : index
    %15 = memref.load %arg5[%c2_5] : memref<9xf32, #tpu.memory_space<smem>>
    %16 = vector.broadcast %15 : f32 to vector<8x128xf32>
    %c3 = arith.constant 3 : index
    %17 = memref.load %arg5[%c3] : memref<9xf32, #tpu.memory_space<smem>>
    %18 = vector.broadcast %17 : f32 to vector<8x128xf32>
    %c4 = arith.constant 4 : index
    %19 = memref.load %arg5[%c4] : memref<9xf32, #tpu.memory_space<smem>>
    %20 = vector.broadcast %19 : f32 to vector<8x128xf32>
    %c5 = arith.constant 5 : index
    %21 = memref.load %arg5[%c5] : memref<9xf32, #tpu.memory_space<smem>>
    %22 = vector.broadcast %21 : f32 to vector<8x128xf32>
    %c6 = arith.constant 6 : index
    %23 = memref.load %arg5[%c6] : memref<9xf32, #tpu.memory_space<smem>>
    %24 = vector.broadcast %23 : f32 to vector<8x128xf32>
    %c7 = arith.constant 7 : index
    %25 = memref.load %arg5[%c7] : memref<9xf32, #tpu.memory_space<smem>>
    %26 = vector.broadcast %25 : f32 to vector<8x128xf32>
    %c8 = arith.constant 8 : index
    %27 = memref.load %arg5[%c8] : memref<9xf32, #tpu.memory_space<smem>>
    %28 = vector.broadcast %27 : f32 to vector<8x128xf32>
    %c0_6 = arith.constant 0 : index
    %29 = memref.load %arg6[%c0_6] : memref<3xf32, #tpu.memory_space<smem>>
    %30 = vector.broadcast %29 : f32 to vector<8x128xf32>
    %c1_7 = arith.constant 1 : index
    %31 = memref.load %arg6[%c1_7] : memref<3xf32, #tpu.memory_space<smem>>
    %32 = vector.broadcast %31 : f32 to vector<8x128xf32>
    %c2_8 = arith.constant 2 : index
    %33 = memref.load %arg6[%c2_8] : memref<3xf32, #tpu.memory_space<smem>>
    %34 = vector.broadcast %33 : f32 to vector<8x128xf32>
    %c0_i32 = arith.constant 0 : i32
    %c4_i32 = arith.constant 4 : i32
    %35 = arith.addi %c0_i32, %c4_i32 : i32
    %c1_i32 = arith.constant 1 : i32
    scf.for %arg8 = %c0_i32 to %35 step %c1_i32  : i32 {
      %c1_i32_10 = arith.constant 1 : i32
      %36 = arith.muli %arg8, %c1_i32_10 : i32
      %c0_i32_11 = arith.constant 0 : i32
      %37 = arith.addi %c0_i32_11, %36 : i32
      %c8_i32 = arith.constant 8 : i32
      %38 = arith.muli %37, %c8_i32 : i32
      %39 = tpu.assume_multiple %38, 8 : i32
      %c0_12 = arith.constant 0 : index
      %40 = arith.index_cast %39 : i32 to index
      %c0_13 = arith.constant 0 : index
      %41 = vector.load %arg2[%c0_12, %40, %c0_13] : memref<3x32x128xf32, #tpu.memory_space<vmem>>, vector<1x8x128xf32>
      %42 = vector.shape_cast %41 : vector<1x8x128xf32> to vector<8x128xf32>
      %c1_14 = arith.constant 1 : index
      %43 = arith.index_cast %39 : i32 to index
      %c0_15 = arith.constant 0 : index
      %44 = vector.load %arg2[%c1_14, %43, %c0_15] : memref<3x32x128xf32, #tpu.memory_space<vmem>>, vector<1x8x128xf32>
      %45 = vector.shape_cast %44 : vector<1x8x128xf32> to vector<8x128xf32>
      %c2_16 = arith.constant 2 : index
      %46 = arith.index_cast %39 : i32 to index
      %c0_17 = arith.constant 0 : index
      %47 = vector.load %arg2[%c2_16, %46, %c0_17] : memref<3x32x128xf32, #tpu.memory_space<vmem>>, vector<1x8x128xf32>
      %48 = vector.shape_cast %47 : vector<1x8x128xf32> to vector<8x128xf32>
      %c0_18 = arith.constant 0 : index
      %49 = arith.index_cast %39 : i32 to index
      %c0_19 = arith.constant 0 : index
      %50 = vector.load %arg1[%c0_18, %49, %c0_19] : memref<3x32x128xf32, #tpu.memory_space<vmem>>, vector<1x8x128xf32>
      %51 = vector.shape_cast %50 : vector<1x8x128xf32> to vector<8x128xf32>
      %52 = arith.subf %51, %1 : vector<8x128xf32>
      %c1_20 = arith.constant 1 : index
      %53 = arith.index_cast %39 : i32 to index
      %c0_21 = arith.constant 0 : index
      %54 = vector.load %arg1[%c1_20, %53, %c0_21] : memref<3x32x128xf32, #tpu.memory_space<vmem>>, vector<1x8x128xf32>
      %55 = vector.shape_cast %54 : vector<1x8x128xf32> to vector<8x128xf32>
      %56 = arith.subf %55, %3 : vector<8x128xf32>
      %c2_22 = arith.constant 2 : index
      %57 = arith.index_cast %39 : i32 to index
      %c0_23 = arith.constant 0 : index
      %58 = vector.load %arg1[%c2_22, %57, %c0_23] : memref<3x32x128xf32, #tpu.memory_space<vmem>>, vector<1x8x128xf32>
      %59 = vector.shape_cast %58 : vector<1x8x128xf32> to vector<8x128xf32>
      %60 = arith.subf %59, %5 : vector<8x128xf32>
      %61 = arith.mulf %52, %52 : vector<8x128xf32>
      %62 = arith.mulf %56, %56 : vector<8x128xf32>
      %63 = arith.addf %61, %62 : vector<8x128xf32>
      %64 = arith.mulf %60, %60 : vector<8x128xf32>
      %65 = arith.addf %63, %64 : vector<8x128xf32>
      %66 = math.sqrt %65 : vector<8x128xf32>
      %67 = arith.subf %66, %7 : vector<8x128xf32>
      %c0_i32_24 = arith.constant 0 : i32
      %68 = arith.mulf %67, %42 : vector<8x128xf32>
      %69 = arith.addf %68, %52 : vector<8x128xf32>
      %70 = arith.mulf %67, %45 : vector<8x128xf32>
      %71 = arith.addf %70, %56 : vector<8x128xf32>
      %72 = arith.mulf %67, %48 : vector<8x128xf32>
      %73 = arith.addf %72, %60 : vector<8x128xf32>
      %74 = arith.mulf %69, %69 : vector<8x128xf32>
      %75 = arith.mulf %71, %71 : vector<8x128xf32>
      %76 = arith.addf %74, %75 : vector<8x128xf32>
      %77 = arith.mulf %73, %73 : vector<8x128xf32>
      %78 = arith.addf %76, %77 : vector<8x128xf32>
      %79 = math.sqrt %78 : vector<8x128xf32>
      %80 = arith.subf %79, %7 : vector<8x128xf32>
      %c1_i32_25 = arith.constant 1 : i32
      %81 = arith.mulf %80, %42 : vector<8x128xf32>
      %82 = arith.addf %81, %69 : vector<8x128xf32>
      %83 = arith.mulf %80, %45 : vector<8x128xf32>
      %84 = arith.addf %83, %71 : vector<8x128xf32>
      %85 = arith.mulf %80, %48 : vector<8x128xf32>
      %86 = arith.addf %85, %73 : vector<8x128xf32>
      %87 = arith.mulf %82, %82 : vector<8x128xf32>
      %88 = arith.mulf %84, %84 : vector<8x128xf32>
      %89 = arith.addf %87, %88 : vector<8x128xf32>
      %90 = arith.mulf %86, %86 : vector<8x128xf32>
      %91 = arith.addf %89, %90 : vector<8x128xf32>
      %92 = math.sqrt %91 : vector<8x128xf32>
      %93 = arith.subf %92, %7 : vector<8x128xf32>
      %c2_i32 = arith.constant 2 : i32
      %94 = arith.mulf %93, %42 : vector<8x128xf32>
      %95 = arith.addf %94, %82 : vector<8x128xf32>
      %96 = arith.mulf %93, %45 : vector<8x128xf32>
      %97 = arith.addf %96, %84 : vector<8x128xf32>
      %98 = arith.mulf %93, %48 : vector<8x128xf32>
      %99 = arith.addf %98, %86 : vector<8x128xf32>
      %100 = arith.mulf %95, %95 : vector<8x128xf32>
      %101 = arith.mulf %97, %97 : vector<8x128xf32>
      %102 = arith.addf %100, %101 : vector<8x128xf32>
      %103 = arith.mulf %99, %99 : vector<8x128xf32>
      %104 = arith.addf %102, %103 : vector<8x128xf32>
      %105 = math.sqrt %104 : vector<8x128xf32>
      %106 = arith.subf %105, %7 : vector<8x128xf32>
      %c3_i32 = arith.constant 3 : i32
      %107 = arith.mulf %106, %42 : vector<8x128xf32>
      %108 = arith.addf %107, %95 : vector<8x128xf32>
      %109 = arith.mulf %106, %45 : vector<8x128xf32>
      %110 = arith.addf %109, %97 : vector<8x128xf32>
      %111 = arith.mulf %106, %48 : vector<8x128xf32>
      %112 = arith.addf %111, %99 : vector<8x128xf32>
      %113 = arith.mulf %108, %108 : vector<8x128xf32>
      %114 = arith.mulf %110, %110 : vector<8x128xf32>
      %115 = arith.addf %113, %114 : vector<8x128xf32>
      %116 = arith.mulf %112, %112 : vector<8x128xf32>
      %117 = arith.addf %115, %116 : vector<8x128xf32>
      %118 = math.sqrt %117 : vector<8x128xf32>
      %119 = arith.subf %118, %7 : vector<8x128xf32>
      %c4_i32_26 = arith.constant 4 : i32
      %120 = arith.mulf %119, %42 : vector<8x128xf32>
      %121 = arith.addf %120, %108 : vector<8x128xf32>
      %122 = arith.mulf %119, %45 : vector<8x128xf32>
      %123 = arith.addf %122, %110 : vector<8x128xf32>
      %124 = arith.mulf %119, %48 : vector<8x128xf32>
      %125 = arith.addf %124, %112 : vector<8x128xf32>
      %126 = arith.mulf %121, %121 : vector<8x128xf32>
      %127 = arith.mulf %123, %123 : vector<8x128xf32>
      %128 = arith.addf %126, %127 : vector<8x128xf32>
      %129 = arith.mulf %125, %125 : vector<8x128xf32>
      %130 = arith.addf %128, %129 : vector<8x128xf32>
      %131 = math.sqrt %130 : vector<8x128xf32>
      %132 = arith.subf %131, %7 : vector<8x128xf32>
      %c5_i32 = arith.constant 5 : i32
      %133 = arith.mulf %132, %42 : vector<8x128xf32>
      %134 = arith.addf %133, %121 : vector<8x128xf32>
      %135 = arith.mulf %132, %45 : vector<8x128xf32>
      %136 = arith.addf %135, %123 : vector<8x128xf32>
      %137 = arith.mulf %132, %48 : vector<8x128xf32>
      %138 = arith.addf %137, %125 : vector<8x128xf32>
      %139 = arith.mulf %134, %134 : vector<8x128xf32>
      %140 = arith.mulf %136, %136 : vector<8x128xf32>
      %141 = arith.addf %139, %140 : vector<8x128xf32>
      %142 = arith.mulf %138, %138 : vector<8x128xf32>
      %143 = arith.addf %141, %142 : vector<8x128xf32>
      %144 = math.sqrt %143 : vector<8x128xf32>
      %145 = arith.subf %144, %7 : vector<8x128xf32>
      %c6_i32 = arith.constant 6 : i32
      %146 = arith.mulf %145, %42 : vector<8x128xf32>
      %147 = arith.addf %146, %134 : vector<8x128xf32>
      %148 = arith.mulf %145, %45 : vector<8x128xf32>
      %149 = arith.addf %148, %136 : vector<8x128xf32>
      %150 = arith.mulf %145, %48 : vector<8x128xf32>
      %151 = arith.addf %150, %138 : vector<8x128xf32>
      %152 = arith.mulf %147, %147 : vector<8x128xf32>
      %153 = arith.mulf %149, %149 : vector<8x128xf32>
      %154 = arith.addf %152, %153 : vector<8x128xf32>
      %155 = arith.mulf %151, %151 : vector<8x128xf32>
      %156 = arith.addf %154, %155 : vector<8x128xf32>
      %157 = math.sqrt %156 : vector<8x128xf32>
      %158 = arith.subf %157, %7 : vector<8x128xf32>
      %c7_i32 = arith.constant 7 : i32
      %159 = arith.mulf %158, %42 : vector<8x128xf32>
      %160 = arith.addf %159, %147 : vector<8x128xf32>
      %161 = arith.mulf %158, %45 : vector<8x128xf32>
      %162 = arith.addf %161, %149 : vector<8x128xf32>
      %163 = arith.mulf %158, %48 : vector<8x128xf32>
      %164 = arith.addf %163, %151 : vector<8x128xf32>
      %165 = arith.mulf %160, %160 : vector<8x128xf32>
      %166 = arith.mulf %162, %162 : vector<8x128xf32>
      %167 = arith.addf %165, %166 : vector<8x128xf32>
      %168 = arith.mulf %164, %164 : vector<8x128xf32>
      %169 = arith.addf %167, %168 : vector<8x128xf32>
      %170 = math.sqrt %169 : vector<8x128xf32>
      %171 = arith.subf %170, %7 : vector<8x128xf32>
      %c8_i32_27 = arith.constant 8 : i32
      %172 = arith.mulf %171, %42 : vector<8x128xf32>
      %173 = arith.addf %172, %160 : vector<8x128xf32>
      %174 = arith.mulf %171, %45 : vector<8x128xf32>
      %175 = arith.addf %174, %162 : vector<8x128xf32>
      %176 = arith.mulf %171, %48 : vector<8x128xf32>
      %177 = arith.addf %176, %164 : vector<8x128xf32>
      %178 = arith.mulf %173, %173 : vector<8x128xf32>
      %179 = arith.mulf %175, %175 : vector<8x128xf32>
      %180 = arith.addf %178, %179 : vector<8x128xf32>
      %181 = arith.mulf %177, %177 : vector<8x128xf32>
      %182 = arith.addf %180, %181 : vector<8x128xf32>
      %183 = math.sqrt %182 : vector<8x128xf32>
      %184 = arith.subf %183, %7 : vector<8x128xf32>
      %c9_i32 = arith.constant 9 : i32
      %185 = arith.mulf %184, %42 : vector<8x128xf32>
      %186 = arith.addf %185, %173 : vector<8x128xf32>
      %187 = arith.mulf %184, %45 : vector<8x128xf32>
      %188 = arith.addf %187, %175 : vector<8x128xf32>
      %189 = arith.mulf %184, %48 : vector<8x128xf32>
      %190 = arith.addf %189, %177 : vector<8x128xf32>
      %191 = arith.mulf %186, %186 : vector<8x128xf32>
      %192 = arith.mulf %188, %188 : vector<8x128xf32>
      %193 = arith.addf %191, %192 : vector<8x128xf32>
      %194 = arith.mulf %190, %190 : vector<8x128xf32>
      %195 = arith.addf %193, %194 : vector<8x128xf32>
      %196 = math.sqrt %195 : vector<8x128xf32>
      %197 = arith.subf %196, %7 : vector<8x128xf32>
      %c10_i32 = arith.constant 10 : i32
      %198 = arith.mulf %197, %42 : vector<8x128xf32>
      %199 = arith.addf %198, %186 : vector<8x128xf32>
      %200 = arith.mulf %197, %45 : vector<8x128xf32>
      %201 = arith.addf %200, %188 : vector<8x128xf32>
      %202 = arith.mulf %197, %48 : vector<8x128xf32>
      %203 = arith.addf %202, %190 : vector<8x128xf32>
      %204 = arith.mulf %199, %199 : vector<8x128xf32>
      %205 = arith.mulf %201, %201 : vector<8x128xf32>
      %206 = arith.addf %204, %205 : vector<8x128xf32>
      %207 = arith.mulf %203, %203 : vector<8x128xf32>
      %208 = arith.addf %206, %207 : vector<8x128xf32>
      %209 = math.sqrt %208 : vector<8x128xf32>
      %210 = arith.subf %209, %7 : vector<8x128xf32>
      %c11_i32 = arith.constant 11 : i32
      %211 = arith.mulf %210, %42 : vector<8x128xf32>
      %212 = arith.addf %211, %199 : vector<8x128xf32>
      %213 = arith.mulf %210, %45 : vector<8x128xf32>
      %214 = arith.addf %213, %201 : vector<8x128xf32>
      %215 = arith.mulf %210, %48 : vector<8x128xf32>
      %216 = arith.addf %215, %203 : vector<8x128xf32>
      %217 = arith.mulf %212, %212 : vector<8x128xf32>
      %218 = arith.mulf %214, %214 : vector<8x128xf32>
      %219 = arith.addf %217, %218 : vector<8x128xf32>
      %220 = arith.mulf %216, %216 : vector<8x128xf32>
      %221 = arith.addf %219, %220 : vector<8x128xf32>
      %222 = math.sqrt %221 : vector<8x128xf32>
      %223 = arith.subf %222, %7 : vector<8x128xf32>
      %c12_i32 = arith.constant 12 : i32
      %224 = arith.mulf %223, %42 : vector<8x128xf32>
      %225 = arith.addf %224, %212 : vector<8x128xf32>
      %226 = arith.mulf %223, %45 : vector<8x128xf32>
      %227 = arith.addf %226, %214 : vector<8x128xf32>
      %228 = arith.mulf %223, %48 : vector<8x128xf32>
      %229 = arith.addf %228, %216 : vector<8x128xf32>
      %230 = arith.mulf %225, %225 : vector<8x128xf32>
      %231 = arith.mulf %227, %227 : vector<8x128xf32>
      %232 = arith.addf %230, %231 : vector<8x128xf32>
      %233 = arith.mulf %229, %229 : vector<8x128xf32>
      %234 = arith.addf %232, %233 : vector<8x128xf32>
      %235 = math.sqrt %234 : vector<8x128xf32>
      %236 = arith.subf %235, %7 : vector<8x128xf32>
      %c13_i32 = arith.constant 13 : i32
      %237 = arith.mulf %236, %42 : vector<8x128xf32>
      %238 = arith.addf %237, %225 : vector<8x128xf32>
      %239 = arith.mulf %236, %45 : vector<8x128xf32>
      %240 = arith.addf %239, %227 : vector<8x128xf32>
      %241 = arith.mulf %236, %48 : vector<8x128xf32>
      %242 = arith.addf %241, %229 : vector<8x128xf32>
      %243 = arith.mulf %238, %238 : vector<8x128xf32>
      %244 = arith.mulf %240, %240 : vector<8x128xf32>
      %245 = arith.addf %243, %244 : vector<8x128xf32>
      %246 = arith.mulf %242, %242 : vector<8x128xf32>
      %247 = arith.addf %245, %246 : vector<8x128xf32>
      %248 = math.sqrt %247 : vector<8x128xf32>
      %249 = arith.subf %248, %7 : vector<8x128xf32>
      %c14_i32 = arith.constant 14 : i32
      %250 = arith.mulf %249, %42 : vector<8x128xf32>
      %251 = arith.addf %250, %238 : vector<8x128xf32>
      %252 = arith.mulf %249, %45 : vector<8x128xf32>
      %253 = arith.addf %252, %240 : vector<8x128xf32>
      %254 = arith.mulf %249, %48 : vector<8x128xf32>
      %255 = arith.addf %254, %242 : vector<8x128xf32>
      %256 = arith.mulf %251, %251 : vector<8x128xf32>
      %257 = arith.mulf %253, %253 : vector<8x128xf32>
      %258 = arith.addf %256, %257 : vector<8x128xf32>
      %259 = arith.mulf %255, %255 : vector<8x128xf32>
      %260 = arith.addf %258, %259 : vector<8x128xf32>
      %261 = math.sqrt %260 : vector<8x128xf32>
      %262 = arith.subf %261, %7 : vector<8x128xf32>
      %c15_i32 = arith.constant 15 : i32
      %263 = arith.mulf %262, %42 : vector<8x128xf32>
      %264 = arith.addf %263, %251 : vector<8x128xf32>
      %265 = arith.mulf %262, %45 : vector<8x128xf32>
      %266 = arith.addf %265, %253 : vector<8x128xf32>
      %267 = arith.mulf %262, %48 : vector<8x128xf32>
      %268 = arith.addf %267, %255 : vector<8x128xf32>
      %269 = arith.mulf %264, %264 : vector<8x128xf32>
      %270 = arith.mulf %266, %266 : vector<8x128xf32>
      %271 = arith.addf %269, %270 : vector<8x128xf32>
      %272 = arith.mulf %268, %268 : vector<8x128xf32>
      %273 = arith.addf %271, %272 : vector<8x128xf32>
      %274 = math.sqrt %273 : vector<8x128xf32>
      %275 = arith.subf %274, %7 : vector<8x128xf32>
      %276 = arith.cmpf olt, %275, %8 : vector<8x128xf32>
      %277 = arith.addf %264, %1 : vector<8x128xf32>
      %278 = arith.addf %266, %3 : vector<8x128xf32>
      %279 = arith.addf %268, %5 : vector<8x128xf32>
      %280 = arith.mulf %277, %12 : vector<8x128xf32>
      %281 = arith.mulf %278, %18 : vector<8x128xf32>
      %282 = arith.addf %280, %281 : vector<8x128xf32>
      %283 = arith.mulf %279, %24 : vector<8x128xf32>
      %284 = arith.addf %282, %283 : vector<8x128xf32>
      %285 = arith.addf %284, %30 : vector<8x128xf32>
      %286 = arith.mulf %10, %285 : vector<8x128xf32>
      %287 = math.tanh %286 : vector<8x128xf32>
      %288 = arith.mulf %10, %287 : vector<8x128xf32>
      %289 = arith.addf %288, %10 : vector<8x128xf32>
      %290 = arith.mulf %277, %14 : vector<8x128xf32>
      %291 = arith.mulf %278, %20 : vector<8x128xf32>
      %292 = arith.addf %290, %291 : vector<8x128xf32>
      %293 = arith.mulf %279, %26 : vector<8x128xf32>
      %294 = arith.addf %292, %293 : vector<8x128xf32>
      %295 = arith.addf %294, %32 : vector<8x128xf32>
      %296 = arith.mulf %10, %295 : vector<8x128xf32>
      %297 = math.tanh %296 : vector<8x128xf32>
      %298 = arith.mulf %10, %297 : vector<8x128xf32>
      %299 = arith.addf %298, %10 : vector<8x128xf32>
      %300 = arith.mulf %277, %16 : vector<8x128xf32>
      %301 = arith.mulf %278, %22 : vector<8x128xf32>
      %302 = arith.addf %300, %301 : vector<8x128xf32>
      %303 = arith.mulf %279, %28 : vector<8x128xf32>
      %304 = arith.addf %302, %303 : vector<8x128xf32>
      %305 = arith.addf %304, %34 : vector<8x128xf32>
      %306 = arith.mulf %10, %305 : vector<8x128xf32>
      %307 = math.tanh %306 : vector<8x128xf32>
      %308 = arith.mulf %10, %307 : vector<8x128xf32>
      %309 = arith.addf %308, %10 : vector<8x128xf32>
      %310 = arith.select %276, %289, %9 : vector<8x128xi1>, vector<8x128xf32>
      %c0_28 = arith.constant 0 : index
      %311 = arith.index_cast %39 : i32 to index
      %c0_29 = arith.constant 0 : index
      %312 = vector.load %arg7[%c0_28, %311, %c0_29] : memref<3x32x128xf32, #tpu.memory_space<vmem>>, vector<1x8x128xf32>
      %313 = vector.shape_cast %312 : vector<1x8x128xf32> to vector<8x128xf32>
      %314 = vector.shape_cast %310 : vector<8x128xf32> to vector<1x8x128xf32>
      tpu.vector_store %arg7[%c0_28, %311, %c0_29], %314 {strides = array<i32>} : memref<3x32x128xf32, #tpu.memory_space<vmem>>, vector<1x8x128xf32>,
      %315 = arith.select %276, %299, %9 : vector<8x128xi1>, vector<8x128xf32>
      %c1_30 = arith.constant 1 : index
      %316 = arith.index_cast %39 : i32 to index
      %c0_31 = arith.constant 0 : index
      %317 = vector.load %arg7[%c1_30, %316, %c0_31] : memref<3x32x128xf32, #tpu.memory_space<vmem>>, vector<1x8x128xf32>
      %318 = vector.shape_cast %317 : vector<1x8x128xf32> to vector<8x128xf32>
      %319 = vector.shape_cast %315 : vector<8x128xf32> to vector<1x8x128xf32>
      tpu.vector_store %arg7[%c1_30, %316, %c0_31], %319 {strides = array<i32>} : memref<3x32x128xf32, #tpu.memory_space<vmem>>, vector<1x8x128xf32>,
      %320 = arith.select %276, %309, %9 : vector<8x128xi1>, vector<8x128xf32>
      %c2_32 = arith.constant 2 : index
      %321 = arith.index_cast %39 : i32 to index
      %c0_33 = arith.constant 0 : index
      %322 = vector.load %arg7[%c2_32, %321, %c0_33] : memref<3x32x128xf32, #tpu.memory_space<vmem>>, vector<1x8x128xf32>
      %323 = vector.shape_cast %322 : vector<1x8x128xf32> to vector<8x128xf32>
      %324 = vector.shape_cast %320 : vector<8x128xf32> to vector<1x8x128xf32>
      tpu.vector_store %arg7[%c2_32, %321, %c0_33], %324 {strides = array<i32>} : memref<3x32x128xf32, #tpu.memory_space<vmem>>, vector<1x8x128xf32>,
    }
    %c4_i32_9 = arith.constant 4 : i32
    return
  }
  func.func @transform_0(%arg0: i32) -> (i32, i32, i32) {
    %c0_i32 = arith.constant 0 : i32
    %c0_i32_0 = arith.constant 0 : i32
    %c0_i32_1 = arith.constant 0 : i32
    return %c0_i32, %arg0, %c0_i32_0 : i32, i32, i32
  }
  func.func @transform_1(%arg0: i32) -> (i32, i32, i32) {
    %c0_i32 = arith.constant 0 : i32
    %c0_i32_0 = arith.constant 0 : i32
    %c0_i32_1 = arith.constant 0 : i32
    return %c0_i32, %arg0, %c0_i32_0 : i32, i32, i32
  }
  func.func @transform_2(%arg0: i32) -> i32 {
    %c0_i32 = arith.constant 0 : i32
    %c0_i32_0 = arith.constant 0 : i32
    return %c0_i32 : i32
  }
  func.func @transform_3(%arg0: i32) -> i32 {
    %c0_i32 = arith.constant 0 : i32
    %c0_i32_0 = arith.constant 0 : i32
    return %c0_i32 : i32
  }
  func.func @transform_4(%arg0: i32) -> i32 {
    %c0_i32 = arith.constant 0 : i32
    %c0_i32_0 = arith.constant 0 : i32
    return %c0_i32 : i32
  }
  func.func @transform_5(%arg0: i32) -> i32 {
    %c0_i32 = arith.constant 0 : i32
    %c0_i32_0 = arith.constant 0 : i32
    return %c0_i32 : i32
  }
  func.func @transform_6(%arg0: i32) -> (i32, i32, i32) {
    %c0_i32 = arith.constant 0 : i32
    %c0_i32_0 = arith.constant 0 : i32
    %c0_i32_1 = arith.constant 0 : i32
    return %c0_i32, %arg0, %c0_i32_0 : i32, i32, i32
  }
}

</mosaic_0001>

<llo_original>
// kernel: tpu_custom_call.1
$region0: #{tpu_custom_call.1}
  #allocation0 [shape = 'u32[]', space=smem, size = 0x4, offset = 0x4, fixed_abs, tag = 'smem constant byte address 0x4 - core index']
  #allocation1 [shape = 'u32[144,128]{1,0:T(1,128)}', space=vmem, size = 0x12000, scoped, tag = 'internal scratch']
  #allocation2 [shape = 'f32[1]{0:T(128)S(6)}', space=smem, size = 0x200, scoped, tag = 'scoped memory for tpu_custom_call.1']
  #allocation14 [shape = 's32[]', space=sflag, size = 0x4, offset = 0, fixed_abs, tag = 'sflag constant byte address 0x0 - dummy sync flag']
  #allocation16 [shape = 's32[]', space=sflag, size = 0x4, offset = 0, fixed_abs, tag = 'sflag constant byte address 0x0 - dummy sync flag']
  #allocation18 [shape = 's32[]', space=sflag, size = 0x4, offset = 0, fixed_abs, tag = 'sflag constant byte address 0x0 - dummy sync flag']
  %s0 = inlined_call_operand.hbm [shape: f32[3,128,128], index: 0, kind: input, shape index: {}]
  %s1 = inlined_call_operand.hbm [shape: f32[3,128,128], index: 1, kind: input, shape index: {}]
  %s2 = inlined_call_operand.vmem [shape: f32[3], index: 2, kind: input, shape index: {}]
  %s3 = inlined_call_operand.<no memory space> [shape: f32[1], index: 3, kind: input, shape index: {}]
  %s4 = inlined_call_operand.vmem [shape: f32[9], index: 4, kind: input, shape index: {}]
  %s5 = inlined_call_operand.vmem [shape: f32[3], index: 5, kind: input, shape index: {}]
  %s6 = inlined_call_operand.hbm [shape: f32[3,128,128], index: 6, kind: output, shape index: {}]
  %s7 = sld [smem:[#allocation0]]
  $region84: #{tpu_custom_call.1} parent=0
    _
  %s9 = ssub.s32 1, %s7
  %s10 = scalar_select 0, %s9, %s7
  %11 = sst [smem:[#allocation2]] %s3
  $region1: #{tpu_custom_call.1} parent=0
    #allocation3 [shape = 'u8[98304]{0}', space=vmem, size = 0x18000, scoped, tag = 'input window, operand 0']
    #allocation4 [shape = 's32[2]{0}', space=sflag, size = 0x8, scoped, tag = 'scoped memory for tpu_custom_call.1']
    #allocation5 [shape = 's32[2]{0}', space=sflag, size = 0x8, scoped, tag = 'scoped memory for tpu_custom_call.1']
    #allocation6 [shape = 's32[2]{0}', space=sflag, size = 0x8, scoped, tag = 'scoped memory for tpu_custom_call.1']
    #allocation7 [shape = 'u8[98304]{0}', space=vmem, size = 0x18000, scoped, tag = 'input window, operand 1']
    #allocation8 [shape = 's32[2]{0}', space=sflag, size = 0x8, scoped, tag = 'scoped memory for tpu_custom_call.1']
    #allocation9 [shape = 'u8[512]{0}', space=smem, size = 0x200, scoped, tag = 'input window, operand 2, single buffered']
    #allocation10 [shape = 'u8[512]{0}', space=smem, size = 0x200, scoped, tag = 'input window, operand 4, single buffered']
    #allocation11 [shape = 's32[1]{0}', space=sflag, size = 0x4, scoped, tag = 'scoped memory for tpu_custom_call.1']
    #allocation12 [shape = 'u8[512]{0}', space=smem, size = 0x200, scoped, tag = 'input window, operand 5, single buffered']
    #allocation13 [shape = 'u8[98304]{0}', space=vmem, size = 0x18000, scoped, tag = 'output window, operand 0']
    %12 = vsyncpa [#allocation4], 0
    %s13 = scalar_lea.sflag [#allocation4], 1
    %14 = vsyncpa %s13, 0
    %15 = vsyncpa [#allocation8], 0
    %s16 = scalar_lea.sflag [#allocation8], 1
    %17 = vsyncpa %s16, 0
    %18 = vsyncpa [#allocation6], 0
    %19 = vsyncpa [#allocation11], 0
    %20 = vsyncpa [#allocation5], 0
    %s21 = scalar_lea.sflag [#allocation5], 1
    %22 = vsyncpa %s21, 0
    loop: start=0, step=1, limit=6
    $region2: #{tpu_custom_call.1} parent=1 // loop_pre_header
      _
    $region3: #{tpu_custom_call.1} parent=1 // loop_header
      %s24 = sphi 0, %s28
      %p25 = scmp.ge.s32.totalorder %s24, 6
      %s34 = sphi 0, %s36
      %s37 = sphi 0, %s34
      %s38 = sphi 0, %s37
      %s54 = sphi 0, %s38
      %s60 = sphi 0, %s62
      %s63 = sphi 0, %s60
      %s64 = sphi 0, %s63
      %s80 = sphi 0, %s64
      %s84 = sphi 0, %s84
      %s86 = sphi 0, %s84
      %s87 = sphi 0, %s86
      %s101 = sphi 0, %s87
      %s105 = sphi 0, %s105
      %s107 = sphi 0, %s105
      %s108 = sphi 0, %s107
      %s122 = sphi 0, %s108
      %s126 = sphi 0, %s126
      %s128 = sphi 0, %s126
      %s129 = sphi 0, %s128
      %s143 = sphi 0, %s129
      %s147 = sphi 0, %s147
      %s149 = sphi 0, %s147
      %s150 = sphi 0, %s149
      %s164 = sphi 0, %s150
      %s170 = sphi 0, %s172
      %s173 = sphi 0, %s170
      %s174 = sphi 0, %s173
      %s190 = sphi 0, %s174
    $region4: #{tpu_custom_call.1} parent=1 // loop_header_branch
      %27 = sbr.rel (%p25) target = $region8
    $region5: #{tpu_custom_call.1} parent=1 // loop_body
      %s29 = ssub.s32 %s24, 1
      %s30 = ssub.s32 %s24, 2
      %s31 = sadd.s32 %s24, 1
      %s32 = ssub.s32 %s24, %s31
      %p33 = scmp.eq.s32.totalorder %s32, 0
      %s35 = sadd.s32 %s34, 1
      %s36 = scalar_select %p33, %s34, %s35
      %p39 = pneg %p33
      %p40 = scmp.eq.s32.totalorder %s24, 3
      %p41 = por %p39, %p40
      %p42 = scmp.ne.s32.totalorder %s34, %s37
      %p43 = scmp.eq.s32.totalorder %s24, 0
      %p44 = por %p42, %p43
      %p45 = scmp.ne.s32.totalorder %s34, %s37
      %p46 = scmp.eq.s32.totalorder %s29, 3
      %p47 = por %p45, %p46
      %p48 = scmp.ne.s32.totalorder %s37, %s38
      %p49 = scmp.eq.s32.totalorder %s29, 0
      %p50 = por %p48, %p49
      %p51 = scmp.ne.s32.totalorder %s37, %s38
      %p52 = scmp.eq.s32.totalorder %s30, 3
      %p53 = por %p51, %p52
      %p55 = scmp.ne.s32.totalorder %s38, %s54
      %p56 = scmp.eq.s32.totalorder %s30, 0
      %p57 = por %p55, %p56
      %s58 = ssub.s32 %s24, %s31
      %p59 = scmp.eq.s32.totalorder %s58, 0
      %s61 = sadd.s32 %s60, 1
      %s62 = scalar_select %p59, %s60, %s61
      %p65 = pneg %p59
      %p66 = scmp.eq.s32.totalorder %s24, 3
      %p67 = por %p65, %p66
      %p68 = scmp.ne.s32.totalorder %s60, %s63
      %p69 = scmp.eq.s32.totalorder %s24, 0
      %p70 = por %p68, %p69
      %p71 = scmp.ne.s32.totalorder %s60, %s63
      %p72 = scmp.eq.s32.totalorder %s29, 3
      %p73 = por %p71, %p72
      %p74 = scmp.ne.s32.totalorder %s63, %s64
      %p75 = scmp.eq.s32.totalorder %s29, 0
      %p76 = por %p74, %p75
      %p77 = scmp.ne.s32.totalorder %s63, %s64
      %p78 = scmp.eq.s32.totalorder %s30, 3
      %p79 = por %p77, %p78
      %p81 = scmp.ne.s32.totalorder %s64, %s80
      %p82 = scmp.eq.s32.totalorder %s30, 0
      %p83 = por %p81, %p82
      %s85 = sadd.s32 %s84, 1
      %p88 = scmp.eq.s32.totalorder %s24, 3
      %p89 = scmp.ne.s32.totalorder %s84, %s86
      %p90 = scmp.eq.s32.totalorder %s24, 0
      %p91 = por %p89, %p90
      %p92 = scmp.ne.s32.totalorder %s84, %s86
      %p93 = scmp.eq.s32.totalorder %s29, 3
      %p94 = por %p92, %p93
      %p95 = scmp.ne.s32.totalorder %s86, %s87
      %p96 = scmp.eq.s32.totalorder %s29, 0
      %p97 = por %p95, %p96
      %p98 = scmp.ne.s32.totalorder %s86, %s87
      %p99 = scmp.eq.s32.totalorder %s30, 3
      %p100 = por %p98, %p99
      %p102 = scmp.ne.s32.totalorder %s87, %s101
      %p103 = scmp.eq.s32.totalorder %s30, 0
      %p104 = por %p102, %p103
      %s106 = sadd.s32 %s105, 1
      %p109 = scmp.eq.s32.totalorder %s24, 3
      %p110 = scmp.ne.s32.totalorder %s105, %s107
      %p111 = scmp.eq.s32.totalorder %s24, 0
      %p112 = por %p110, %p111
      %p113 = scmp.ne.s32.totalorder %s105, %s107
      %p114 = scmp.eq.s32.totalorder %s29, 3
      %p115 = por %p113, %p114
      %p116 = scmp.ne.s32.totalorder %s107, %s108
      %p117 = scmp.eq.s32.totalorder %s29, 0
      %p118 = por %p116, %p117
      %p119 = scmp.ne.s32.totalorder %s107, %s108
      %p120 = scmp.eq.s32.totalorder %s30, 3
      %p121 = por %p119, %p120
      %p123 = scmp.ne.s32.totalorder %s108, %s122
      %p124 = scmp.eq.s32.totalorder %s30, 0
      %p125 = por %p123, %p124
      %s127 = sadd.s32 %s126, 1
      %p130 = scmp.eq.s32.totalorder %s24, 3
      %p131 = scmp.ne.s32.totalorder %s126, %s128
      %p132 = scmp.eq.s32.totalorder %s24, 0
      %p133 = por %p131, %p132
      %p134 = scmp.ne.s32.totalorder %s126, %s128
      %p135 = scmp.eq.s32.totalorder %s29, 3
      %p136 = por %p134, %p135
      %p137 = scmp.ne.s32.totalorder %s128, %s129
      %p138 = scmp.eq.s32.totalorder %s29, 0
      %p139 = por %p137, %p138
      %p140 = scmp.ne.s32.totalorder %s128, %s129
      %p141 = scmp.eq.s32.totalorder %s30, 3
      %p142 = por %p140, %p141
      %p144 = scmp.ne.s32.totalorder %s129, %s143
      %p145 = scmp.eq.s32.totalorder %s30, 0
      %p146 = por %p144, %p145
      %s148 = sadd.s32 %s147, 1
      %p151 = scmp.eq.s32.totalorder %s24, 3
      %p152 = scmp.ne.s32.totalorder %s147, %s149
      %p153 = scmp.eq.s32.totalorder %s24, 0
      %p154 = por %p152, %p153
      %p155 = scmp.ne.s32.totalorder %s147, %s149
      %p156 = scmp.eq.s32.totalorder %s29, 3
      %p157 = por %p155, %p156
      %p158 = scmp.ne.s32.totalorder %s149, %s150
      %p159 = scmp.eq.s32.totalorder %s29, 0
      %p160 = por %p158, %p159
      %p161 = scmp.ne.s32.totalorder %s149, %s150
      %p162 = scmp.eq.s32.totalorder %s30, 3
      %p163 = por %p161, %p162
      %p165 = scmp.ne.s32.totalorder %s150, %s164
      %p166 = scmp.eq.s32.totalorder %s30, 0
      %p167 = por %p165, %p166
      %s168 = ssub.s32 %s24, %s31
      %p169 = scmp.eq.s32.totalorder %s168, 0
      %s171 = sadd.s32 %s170, 1
      %s172 = scalar_select %p169, %s170, %s171
      %p175 = pneg %p169
      %p176 = scmp.eq.s32.totalorder %s24, 3
      %p177 = por %p175, %p176
      %p178 = scmp.ne.s32.totalorder %s170, %s173
      %p179 = scmp.eq.s32.totalorder %s24, 0
      %p180 = por %p178, %p179
      %p181 = scmp.ne.s32.totalorder %s170, %s173
      %p182 = scmp.eq.s32.totalorder %s29, 3
      %p183 = por %p181, %p182
      %p184 = scmp.ne.s32.totalorder %s173, %s174
      %p185 = scmp.eq.s32.totalorder %s29, 0
      %p186 = por %p184, %p185
      %p187 = scmp.ne.s32.totalorder %s173, %s174
      %p188 = scmp.eq.s32.totalorder %s30, 3
      %p189 = por %p187, %p188
      %p191 = scmp.ne.s32.totalorder %s174, %s190
      %p192 = scmp.eq.s32.totalorder %s30, 0
      %p193 = por %p191, %p192
      %p194 = scmp.le.s32.totalorder 1, %s24
      %p195 = scmp.lt.s32.totalorder %s24, 5
      %p196 = pnand %p194, %p195
      %p197 = pneg %p196
      // Predicated region
      $region9: #{tpu_custom_call.1} parent=5 // pred_check
        _
      $region10: #{tpu_custom_call.1} parent=5 // pred_check_branch
        %199 = sbr.rel (%p196) target = $region12
      $region11: #{tpu_custom_call.1} parent=5 // pred_region
        %s200 = ssub.s32 %s24, 1
        // Predicated region
        $region13: #{tpu_custom_call.1} parent=11 // pred_check
          %p201 = pneg %p97
        $region14: #{tpu_custom_call.1} parent=11 // pred_check_branch
          %203 = sbr.rel (%p201) target = $region16
        $region15: #{tpu_custom_call.1} parent=11 // pred_region
          %s205 = ssub.s32 16, 16
          %206 = vsyncadd [#allocation6], %s205
          %s208 = sshll.u32 %s2, 4
          %s209 = int_to_ptr.vmem [resolvable:$true] %s208
          %211 = dma.vmem_to_smem %s209, 16, [#allocation9], [#allocation6]
        $region16: #{tpu_custom_call.1} parent=11 // pred_fallthru
          _
        // Predicated region
        $region17: #{tpu_custom_call.1} parent=11 // pred_check
          %p212 = pneg %p118
        $region18: #{tpu_custom_call.1} parent=11 // pred_check_branch
          %214 = sbr.rel (%p212) target = $region20
        $region19: #{tpu_custom_call.1} parent=11 // pred_region
          _
        $region20: #{tpu_custom_call.1} parent=11 // pred_fallthru
          _
        // Predicated region
        $region21: #{tpu_custom_call.1} parent=11 // pred_check
          %p215 = pneg %p139
        $region22: #{tpu_custom_call.1} parent=11 // pred_check_branch
          %217 = sbr.rel (%p215) target = $region24
        $region23: #{tpu_custom_call.1} parent=11 // pred_region
          %s219 = ssub.s32 16, 16
          %220 = vsyncadd [#allocation11], %s219
          %s222 = sshll.u32 %s4, 4
          %s223 = int_to_ptr.vmem [resolvable:$true] %s222
          %225 = dma.vmem_to_smem %s223, 16, [#allocation10], [#allocation11]
        $region24: #{tpu_custom_call.1} parent=11 // pred_fallthru
          _
        // Predicated region
        $region25: #{tpu_custom_call.1} parent=11 // pred_check
          %p226 = pneg %p160
        $region26: #{tpu_custom_call.1} parent=11 // pred_check_branch
          %228 = sbr.rel (%p226) target = $region28
        $region27: #{tpu_custom_call.1} parent=11 // pred_region
          %s230 = ssub.s32 16, 16
          %231 = vsyncadd [#allocation11], %s230
          %s233 = sshll.u32 %s5, 4
          %s234 = int_to_ptr.vmem [resolvable:$true] %s233
          %236 = dma.vmem_to_smem %s234, 16, [#allocation12], [#allocation11]
        $region28: #{tpu_custom_call.1} parent=11 // pred_fallthru
          _
      $region12: #{tpu_custom_call.1} parent=5 // pred_fallthru
        _
      %p237 = scmp.lt.s32.totalorder %s24, 4
      // Predicated region
      $region29: #{tpu_custom_call.1} parent=5 // pred_check
        %p238 = pneg %p237
      $region30: #{tpu_custom_call.1} parent=5 // pred_check_branch
        %240 = sbr.rel (%p238) target = $region32
      $region31: #{tpu_custom_call.1} parent=5 // pred_region
        // Predicated region
        $region33: #{tpu_custom_call.1} parent=31 // pred_check
          %p241 = pneg %p44
        $region34: #{tpu_custom_call.1} parent=31 // pred_check_branch
          %243 = sbr.rel (%p241) target = $region36
        $region35: #{tpu_custom_call.1} parent=31 // pred_region
          #allocation15 [shape = 'u32[6]{0}', space=smem, size = 0x18, scoped, tag = 'DMA stride descriptor']
          %s244 = sand.u32 %s34, 1
          %s245 = scalar_lea.sflag [#allocation4], %s244
          %s246 = sand.u32 %s34, 1
          %s247 = smul.addr %s246, 96
          %s248 = scalar_lea.vmem [#allocation3], %s247
          %s249 = smul.u32 4, %s24
          %s251 = ssub.s32 1536, 1536
          %252 = vsyncadd %s245, %s251
          %s253 = smul.addr %s249, 128
          %s254 = scalar_lea.hbm %s0, %s253
          %s256 = sshll.u32 1, 14
          %s257 = sxor.u32 4294967295, %s256
          %s259 = sld [smem:[#allocation0]]
          %s260 = sadd.s32 2, %s259
          %s262 = sshll.u32 7, 26
          %s263 = sxor.u32 4294967295, %s262
          %s264 = sand.u32 0, %s263
          %s265 = sshll.u32 %s260, 26
          %s266 = sor.u32 %s264, %s265
          %s267 = sshll.u32 %s248, 4
          %s268 = int_to_ptr.vmem [resolvable:$true] %s267
          %274 = sst [smem:[#allocation15]] 2048
          %s275 = scalar_lea.smem [#allocation15], 1
          %276 = sst [smem:[%s275]] 512
          %s277 = scalar_lea.smem [#allocation15], 2
          %278 = sst [smem:[%s277]] 4
          %s279 = scalar_lea.smem [#allocation15], 3
          %280 = sst [smem:[%s279]] 128
          %s281 = scalar_lea.smem [#allocation15], 4
          %282 = sst [smem:[%s281]] 128
          %s283 = scalar_lea.smem [#allocation15], 5
          %284 = sst [smem:[%s283]] 8
          %286 = dma.general %s254, 1536, %s268, %s245, 131072, [#allocation15], %s266, 0
        $region36: #{tpu_custom_call.1} parent=31 // pred_fallthru
          _
        // Predicated region
        $region37: #{tpu_custom_call.1} parent=31 // pred_check
          %p287 = pneg %p70
        $region38: #{tpu_custom_call.1} parent=31 // pred_check_branch
          %289 = sbr.rel (%p287) target = $region40
        $region39: #{tpu_custom_call.1} parent=31 // pred_region
          #allocation17 [shape = 'u32[6]{0}', space=smem, size = 0x18, scoped, tag = 'DMA stride descriptor']
          %s290 = sand.u32 %s60, 1
          %s291 = scalar_lea.sflag [#allocation8], %s290
          %s292 = sand.u32 %s60, 1
          %s293 = smul.addr %s292, 96
          %s294 = scalar_lea.vmem [#allocation7], %s293
          %s295 = smul.u32 4, %s24
          %s297 = ssub.s32 1536, 1536
          %298 = vsyncadd %s291, %s297
          %s299 = smul.addr %s295, 128
          %s300 = scalar_lea.hbm %s1, %s299
          %s302 = sshll.u32 1, 14
          %s303 = sxor.u32 4294967295, %s302
          %s305 = sld [smem:[#allocation0]]
          %s306 = sadd.s32 2, %s305
          %s308 = sshll.u32 7, 26
          %s309 = sxor.u32 4294967295, %s308
          %s310 = sand.u32 0, %s309
          %s311 = sshll.u32 %s306, 26
          %s312 = sor.u32 %s310, %s311
          %s313 = sshll.u32 %s294, 4
          %s314 = int_to_ptr.vmem [resolvable:$true] %s313
          %320 = sst [smem:[#allocation17]] 2048
          %s321 = scalar_lea.smem [#allocation17], 1
          %322 = sst [smem:[%s321]] 512
          %s323 = scalar_lea.smem [#allocation17], 2
          %324 = sst [smem:[%s323]] 4
          %s325 = scalar_lea.smem [#allocation17], 3
          %326 = sst [smem:[%s325]] 128
          %s327 = scalar_lea.smem [#allocation17], 4
          %328 = sst [smem:[%s327]] 128
          %s329 = scalar_lea.smem [#allocation17], 5
          %330 = sst [smem:[%s329]] 8
          %332 = dma.general %s300, 1536, %s314, %s291, 131072, [#allocation17], %s312, 0
        $region40: #{tpu_custom_call.1} parent=31 // pred_fallthru
          _
      $region32: #{tpu_custom_call.1} parent=5 // pred_fallthru
        _
      %p333 = scmp.le.s32.totalorder 1, %s24
      %p334 = scmp.lt.s32.totalorder %s24, 5
      %p335 = pnand %p333, %p334
      %p336 = pneg %p335
      // Predicated region
      $region41: #{tpu_custom_call.1} parent=5 // pred_check
        _
      $region42: #{tpu_custom_call.1} parent=5 // pred_check_branch
        %338 = sbr.rel (%p335) target = $region44
      $region43: #{tpu_custom_call.1} parent=5 // pred_region
        %s339 = ssub.s32 %s24, 1
        %s340 = sand.u32 %s37, 1
        %s341 = scalar_lea.sflag [#allocation4], %s340
        %s342 = sand.u32 %s37, 1
        %s343 = smul.addr %s342, 96
        %s344 = scalar_lea.vmem [#allocation3], %s343
        // Predicated region
        $region45: #{tpu_custom_call.1} parent=43 // pred_check
          %p345 = pneg %p50
        $region46: #{tpu_custom_call.1} parent=43 // pred_check_branch
          %347 = sbr.rel (%p345) target = $region48
        $region47: #{tpu_custom_call.1} parent=43 // pred_region
          %348 = dma.done %s341, 1536
        $region48: #{tpu_custom_call.1} parent=43 // pred_fallthru
          _
        %s349 = sand.u32 %s63, 1
        %s350 = scalar_lea.sflag [#allocation8], %s349
        %s351 = sand.u32 %s63, 1
        %s352 = smul.addr %s351, 96
        %s353 = scalar_lea.vmem [#allocation7], %s352
        // Predicated region
        $region49: #{tpu_custom_call.1} parent=43 // pred_check
          %p354 = pneg %p76
        $region50: #{tpu_custom_call.1} parent=43 // pred_check_branch
          %356 = sbr.rel (%p354) target = $region52
        $region51: #{tpu_custom_call.1} parent=43 // pred_region
          %357 = dma.done %s350, 1536
        $region52: #{tpu_custom_call.1} parent=43 // pred_fallthru
          _
        // Predicated region
        $region53: #{tpu_custom_call.1} parent=43 // pred_check
          %p358 = pneg %p97
        $region54: #{tpu_custom_call.1} parent=43 // pred_check_branch
          %360 = sbr.rel (%p358) target = $region56
        $region55: #{tpu_custom_call.1} parent=43 // pred_region
          %361 = dma.done [#allocation6], 16
        $region56: #{tpu_custom_call.1} parent=43 // pred_fallthru
          _
        // Predicated region
        $region57: #{tpu_custom_call.1} parent=43 // pred_check
          %p362 = pneg %p139
        $region58: #{tpu_custom_call.1} parent=43 // pred_check_branch
          %364 = sbr.rel (%p362) target = $region60
        $region59: #{tpu_custom_call.1} parent=43 // pred_region
          %365 = dma.done [#allocation11], 16
        $region60: #{tpu_custom_call.1} parent=43 // pred_fallthru
          _
        // Predicated region
        $region61: #{tpu_custom_call.1} parent=43 // pred_check
          %p366 = pneg %p160
        $region62: #{tpu_custom_call.1} parent=43 // pred_check_branch
          %368 = sbr.rel (%p366) target = $region64
        $region63: #{tpu_custom_call.1} parent=43 // pred_region
          %369 = dma.done [#allocation11], 16
        $region64: #{tpu_custom_call.1} parent=43 // pred_fallthru
          _
        %370 = sfence
        %s371 = sand.u32 %s37, 1
        %s372 = scalar_lea.sflag [#allocation4], %s371
        %s373 = sand.u32 %s37, 1
        %s374 = smul.addr %s373, 96
        %s375 = scalar_lea.vmem [#allocation3], %s374
        %p376 = pneg %p50
        %p377 = pneg %p47
        %s378 = sand.u32 %s63, 1
        %s379 = scalar_lea.sflag [#allocation8], %s378
        %s380 = sand.u32 %s63, 1
        %s381 = smul.addr %s380, 96
        %s382 = scalar_lea.vmem [#allocation7], %s381
        %p383 = pneg %p76
        %p384 = pneg %p73
        %p385 = pneg %p97
        %p386 = pneg %p94
        %p387 = pneg %p118
        %p388 = pneg %p115
        %p389 = pneg %p139
        %p390 = pneg %p136
        %p391 = pneg %p160
        %p392 = pneg %p157
        %p393 = pneg %p186
        %p394 = pneg %p183
        %s395 = sand.u32 %s173, 1
        %s396 = scalar_lea.sflag [#allocation5], %s395
        %s397 = sand.u32 %s173, 1
        %s398 = smul.addr %s397, 96
        %s399 = scalar_lea.vmem [#allocation13], %s398
        %s400 = smul.u32 4, %s29
        %s401 = smul.u32 4, %s29
        %s402 = smul.u32 4, %s29
        %s403 = sld [smem:[#allocation9]]
        %v404 = vstv %s403
        %s405 = sld [smem:[#allocation9 + $0x1]]
        %v406 = vstv %s405
        %s407 = sld [smem:[#allocation9 + $0x2]]
        %v408 = vstv %s407
        %s409 = sld [smem:[#allocation2]]
        %v410 = vstv %s409
        %s411 = sld [smem:[#allocation10]]
        %v412 = vstv %s411
        %s413 = sld [smem:[#allocation10 + $0x1]]
        %v414 = vstv %s413
        %s415 = sld [smem:[#allocation10 + $0x2]]
        %v416 = vstv %s415
        %s417 = sld [smem:[#allocation10 + $0x3]]
        %v418 = vstv %s417
        %s419 = sld [smem:[#allocation10 + $0x4]]
        %v420 = vstv %s419
        %s421 = sld [smem:[#allocation10 + $0x5]]
        %v422 = vstv %s421
        %s423 = sld [smem:[#allocation10 + $0x6]]
        %v424 = vstv %s423
        %s425 = sld [smem:[#allocation10 + $0x7]]
        %v426 = vstv %s425
        %s427 = sld [smem:[#allocation10 + $0x8]]
        %v428 = vstv %s427
        %s429 = sld [smem:[#allocation12]]
        %v430 = vstv %s429
        %s431 = sld [smem:[#allocation12 + $0x1]]
        %v432 = vstv %s431
        %s433 = sld [smem:[#allocation12 + $0x2]]
        %v434 = vstv %s433
        loop: start=0, step=1, limit=4
        $region65: #{tpu_custom_call.1} parent=43 // loop_pre_header
          _
        $region66: #{tpu_custom_call.1} parent=43 // loop_header
          %s436 = sphi 0, %s440
          %p437 = scmp.ge.s32.totalorder %s436, 4
        $region67: #{tpu_custom_call.1} parent=43 // loop_header_branch
          %439 = sbr.rel (%p437) target = $region71
        $region68: #{tpu_custom_call.1} parent=43 // loop_body
          %s441 = smul.u32 %s436, 8
          %s442 = scalar_lea.vmem %s353, %s441 [#allocation7]
          %v443 = vld [vmem:[%s442] sm:$0xff]
          %s444 = sadd.s32 %s441, 32
          %s445 = scalar_lea.vmem %s353, %s444 [#allocation7]
          %v446 = vld [vmem:[%s445] sm:$0xff]
          %s447 = sadd.s32 %s441, 64
          %s448 = scalar_lea.vmem %s353, %s447 [#allocation7]
          %v449 = vld [vmem:[%s448] sm:$0xff]
          %s450 = scalar_lea.vmem %s344, %s441 [#allocation3]
          %v451 = vld [vmem:[%s450] sm:$0xff]
          %v452 = vsub.f32 %v451, %v404
          %s453 = scalar_lea.vmem %s344, %s444 [#allocation3]
          %v454 = vld [vmem:[%s453] sm:$0xff]
          %v455 = vsub.f32 %v454, %v406
          %s456 = scalar_lea.vmem %s344, %s447 [#allocation3]
          %v457 = vld [vmem:[%s456] sm:$0xff]
          %v458 = vsub.f32 %v457, %v408
          %v459 = vmul.f32 %v452, %v452
          %v460 = vmul.f32 %v455, %v455
          %v461 = vadd.f32 %v459, %v460
          %v462 = vmul.f32 %v458, %v458
          %v463 = vadd.f32 %v461, %v462
          %v464 = vrsqrt.pop %v463
          %v465 = vmul.f32 %v463, %v464
          %vm466 = vcmp.eq.f32.partialorder %v463, inf
          %v467 = vsel %vm466, %v463, %v465
          %vm468 = vcmp.eq.f32.partialorder %v463, 0.0
          %v469 = vand.u32 %v463, 2147483648
          %v470 = vsel %vm468, %v469, %v467
          %v471 = vsub.f32 %v470, %v410
          %v472 = vmul.f32 %v471, %v443
          %v473 = vadd.f32 %v472, %v452
          %v474 = vmul.f32 %v471, %v446
          %v475 = vadd.f32 %v474, %v455
          %v476 = vmul.f32 %v471, %v449
          %v477 = vadd.f32 %v476, %v458
          %v478 = vmul.f32 %v473, %v473
          %v479 = vmul.f32 %v475, %v475
          %v480 = vadd.f32 %v478, %v479
          %v481 = vmul.f32 %v477, %v477
          %v482 = vadd.f32 %v480, %v481
          %v483 = vrsqrt.pop %v482
          %v484 = vmul.f32 %v482, %v483
          %vm485 = vcmp.eq.f32.partialorder %v482, inf
          %v486 = vsel %vm485, %v482, %v484
          %vm487 = vcmp.eq.f32.partialorder %v482, 0.0
          %v488 = vand.u32 %v482, 2147483648
          %v489 = vsel %vm487, %v488, %v486
          %v490 = vsub.f32 %v489, %v410
          %v491 = vmul.f32 %v490, %v443
          %v492 = vadd.f32 %v491, %v473
          %v493 = vmul.f32 %v490, %v446
          %v494 = vadd.f32 %v493, %v475
          %v495 = vmul.f32 %v490, %v449
          %v496 = vadd.f32 %v495, %v477
          %v497 = vmul.f32 %v492, %v492
          %v498 = vmul.f32 %v494, %v494
          %v499 = vadd.f32 %v497, %v498
          %v500 = vmul.f32 %v496, %v496
          %v501 = vadd.f32 %v499, %v500
          %v502 = vrsqrt.pop %v501
          %v503 = vmul.f32 %v501, %v502
          %vm504 = vcmp.eq.f32.partialorder %v501, inf
          %v505 = vsel %vm504, %v501, %v503
          %vm506 = vcmp.eq.f32.partialorder %v501, 0.0
          %v507 = vand.u32 %v501, 2147483648
          %v508 = vsel %vm506, %v507, %v505
          %v509 = vsub.f32 %v508, %v410
          %v510 = vmul.f32 %v509, %v443
          %v511 = vadd.f32 %v510, %v492
          %v512 = vmul.f32 %v509, %v446
          %v513 = vadd.f32 %v512, %v494
          %v514 = vmul.f32 %v509, %v449
          %v515 = vadd.f32 %v514, %v496
          %v516 = vmul.f32 %v511, %v511
          %v517 = vmul.f32 %v513, %v513
          %v518 = vadd.f32 %v516, %v517
          %v519 = vmul.f32 %v515, %v515
          %v520 = vadd.f32 %v518, %v519
          %v521 = vrsqrt.pop %v520
          %v522 = vmul.f32 %v520, %v521
          %vm523 = vcmp.eq.f32.partialorder %v520, inf
          %v524 = vsel %vm523, %v520, %v522
          %vm525 = vcmp.eq.f32.partialorder %v520, 0.0
          %v526 = vand.u32 %v520, 2147483648
          %v527 = vsel %vm525, %v526, %v524
          %v528 = vsub.f32 %v527, %v410
          %v529 = vmul.f32 %v528, %v443
          %v530 = vadd.f32 %v529, %v511
          %v531 = vmul.f32 %v528, %v446
          %v532 = vadd.f32 %v531, %v513
          %v533 = vmul.f32 %v528, %v449
          %v534 = vadd.f32 %v533, %v515
          %v535 = vmul.f32 %v530, %v530
          %v536 = vmul.f32 %v532, %v532
          %v537 = vadd.f32 %v535, %v536
          %v538 = vmul.f32 %v534, %v534
          %v539 = vadd.f32 %v537, %v538
          %v540 = vrsqrt.pop %v539
          %v541 = vmul.f32 %v539, %v540
          %vm542 = vcmp.eq.f32.partialorder %v539, inf
          %v543 = vsel %vm542, %v539, %v541
          %vm544 = vcmp.eq.f32.partialorder %v539, 0.0
          %v545 = vand.u32 %v539, 2147483648
          %v546 = vsel %vm544, %v545, %v543
          %v547 = vsub.f32 %v546, %v410
          %v548 = vmul.f32 %v547, %v443
          %v549 = vadd.f32 %v548, %v530
          %v550 = vmul.f32 %v547, %v446
          %v551 = vadd.f32 %v550, %v532
          %v552 = vmul.f32 %v547, %v449
          %v553 = vadd.f32 %v552, %v534
          %v554 = vmul.f32 %v549, %v549
          %v555 = vmul.f32 %v551, %v551
          %v556 = vadd.f32 %v554, %v555
          %v557 = vmul.f32 %v553, %v553
          %v558 = vadd.f32 %v556, %v557
          %v559 = vrsqrt.pop %v558
          %v560 = vmul.f32 %v558, %v559
          %vm561 = vcmp.eq.f32.partialorder %v558, inf
          %v562 = vsel %vm561, %v558, %v560
          %vm563 = vcmp.eq.f32.partialorder %v558, 0.0
          %v564 = vand.u32 %v558, 2147483648
          %v565 = vsel %vm563, %v564, %v562
          %v566 = vsub.f32 %v565, %v410
          %v567 = vmul.f32 %v566, %v443
          %v568 = vadd.f32 %v567, %v549
          %v569 = vmul.f32 %v566, %v446
          %v570 = vadd.f32 %v569, %v551
          %v571 = vmul.f32 %v566, %v449
          %v572 = vadd.f32 %v571, %v553
          %v573 = vmul.f32 %v568, %v568
          %v574 = vmul.f32 %v570, %v570
          %v575 = vadd.f32 %v573, %v574
          %v576 = vmul.f32 %v572, %v572
          %v577 = vadd.f32 %v575, %v576
          %v578 = vrsqrt.pop %v577
          %v579 = vmul.f32 %v577, %v578
          %vm580 = vcmp.eq.f32.partialorder %v577, inf
          %v581 = vsel %vm580, %v577, %v579
          %vm582 = vcmp.eq.f32.partialorder %v577, 0.0
          %v583 = vand.u32 %v577, 2147483648
          %v584 = vsel %vm582, %v583, %v581
          %v585 = vsub.f32 %v584, %v410
          %v586 = vmul.f32 %v585, %v443
          %v587 = vadd.f32 %v586, %v568
          %v588 = vmul.f32 %v585, %v446
          %v589 = vadd.f32 %v588, %v570
          %v590 = vmul.f32 %v585, %v449
          %v591 = vadd.f32 %v590, %v572
          %v592 = vmul.f32 %v587, %v587
          %v593 = vmul.f32 %v589, %v589
          %v594 = vadd.f32 %v592, %v593
          %v595 = vmul.f32 %v591, %v591
          %v596 = vadd.f32 %v594, %v595
          %v597 = vrsqrt.pop %v596
          %v598 = vmul.f32 %v596, %v597
          %vm599 = vcmp.eq.f32.partialorder %v596, inf
          %v600 = vsel %vm599, %v596, %v598
          %vm601 = vcmp.eq.f32.partialorder %v596, 0.0
          %v602 = vand.u32 %v596, 2147483648
          %v603 = vsel %vm601, %v602, %v600
          %v604 = vsub.f32 %v603, %v410
          %v605 = vmul.f32 %v604, %v443
          %v606 = vadd.f32 %v605, %v587
          %v607 = vmul.f32 %v604, %v446
          %v608 = vadd.f32 %v607, %v589
          %v609 = vmul.f32 %v604, %v449
          %v610 = vadd.f32 %v609, %v591
          %v611 = vmul.f32 %v606, %v606
          %v612 = vmul.f32 %v608, %v608
          %v613 = vadd.f32 %v611, %v612
          %v614 = vmul.f32 %v610, %v610
          %v615 = vadd.f32 %v613, %v614
          %v616 = vrsqrt.pop %v615
          %v617 = vmul.f32 %v615, %v616
          %vm618 = vcmp.eq.f32.partialorder %v615, inf
          %v619 = vsel %vm618, %v615, %v617
          %vm620 = vcmp.eq.f32.partialorder %v615, 0.0
          %v621 = vand.u32 %v615, 2147483648
          %v622 = vsel %vm620, %v621, %v619
          %v623 = vsub.f32 %v622, %v410
          %v624 = vmul.f32 %v623, %v443
          %v625 = vadd.f32 %v624, %v606
          %v626 = vmul.f32 %v623, %v446
          %v627 = vadd.f32 %v626, %v608
          %v628 = vmul.f32 %v623, %v449
          %v629 = vadd.f32 %v628, %v610
          %v630 = vmul.f32 %v625, %v625
          %v631 = vmul.f32 %v627, %v627
          %v632 = vadd.f32 %v630, %v631
          %v633 = vmul.f32 %v629, %v629
          %v634 = vadd.f32 %v632, %v633
          %v635 = vrsqrt.pop %v634
          %v636 = vmul.f32 %v634, %v635
          %vm637 = vcmp.eq.f32.partialorder %v634, inf
          %v638 = vsel %vm637, %v634, %v636
          %vm639 = vcmp.eq.f32.partialorder %v634, 0.0
          %v640 = vand.u32 %v634, 2147483648
          %v641 = vsel %vm639, %v640, %v638
          %v642 = vsub.f32 %v641, %v410
          %v643 = vmul.f32 %v642, %v443
          %v644 = vadd.f32 %v643, %v625
          %v645 = vmul.f32 %v642, %v446
          %v646 = vadd.f32 %v645, %v627
          %v647 = vmul.f32 %v642, %v449
          %v648 = vadd.f32 %v647, %v629
          %v649 = vmul.f32 %v644, %v644
          %v650 = vmul.f32 %v646, %v646
          %v651 = vadd.f32 %v649, %v650
          %v652 = vmul.f32 %v648, %v648
          %v653 = vadd.f32 %v651, %v652
          %v654 = vrsqrt.pop %v653
          %v655 = vmul.f32 %v653, %v654
          %vm656 = vcmp.eq.f32.partialorder %v653, inf
          %v657 = vsel %vm656, %v653, %v655
          %vm658 = vcmp.eq.f32.partialorder %v653, 0.0
          %v659 = vand.u32 %v653, 2147483648
          %v660 = vsel %vm658, %v659, %v657
          %v661 = vsub.f32 %v660, %v410
          %v662 = vmul.f32 %v661, %v443
          %v663 = vadd.f32 %v662, %v644
          %v664 = vmul.f32 %v661, %v446
          %v665 = vadd.f32 %v664, %v646
          %v666 = vmul.f32 %v661, %v449
          %v667 = vadd.f32 %v666, %v648
          %v668 = vmul.f32 %v663, %v663
          %v669 = vmul.f32 %v665, %v665
          %v670 = vadd.f32 %v668, %v669
          %v671 = vmul.f32 %v667, %v667
          %v672 = vadd.f32 %v670, %v671
          %v673 = vrsqrt.pop %v672
          %v674 = vmul.f32 %v672, %v673
          %vm675 = vcmp.eq.f32.partialorder %v672, inf
          %v676 = vsel %vm675, %v672, %v674
          %vm677 = vcmp.eq.f32.partialorder %v672, 0.0
          %v678 = vand.u32 %v672, 2147483648
          %v679 = vsel %vm677, %v678, %v676
          %v680 = vsub.f32 %v679, %v410
          %v681 = vmul.f32 %v680, %v443
          %v682 = vadd.f32 %v681, %v663
          %v683 = vmul.f32 %v680, %v446
          %v684 = vadd.f32 %v683, %v665
          %v685 = vmul.f32 %v680, %v449
          %v686 = vadd.f32 %v685, %v667
          %v687 = vmul.f32 %v682, %v682
          %v688 = vmul.f32 %v684, %v684
          %v689 = vadd.f32 %v687, %v688
          %v690 = vmul.f32 %v686, %v686
          %v691 = vadd.f32 %v689, %v690
          %v692 = vrsqrt.pop %v691
          %v693 = vmul.f32 %v691, %v692
          %vm694 = vcmp.eq.f32.partialorder %v691, inf
          %v695 = vsel %vm694, %v691, %v693
          %vm696 = vcmp.eq.f32.partialorder %v691, 0.0
          %v697 = vand.u32 %v691, 2147483648
          %v698 = vsel %vm696, %v697, %v695
          %v699 = vsub.f32 %v698, %v410
          %v700 = vmul.f32 %v699, %v443
          %v701 = vadd.f32 %v700, %v682
          %v702 = vmul.f32 %v699, %v446
          %v703 = vadd.f32 %v702, %v684
          %v704 = vmul.f32 %v699, %v449
          %v705 = vadd.f32 %v704, %v686
          %v706 = vmul.f32 %v701, %v701
          %v707 = vmul.f32 %v703, %v703
          %v708 = vadd.f32 %v706, %v707
          %v709 = vmul.f32 %v705, %v705
          %v710 = vadd.f32 %v708, %v709
          %v711 = vrsqrt.pop %v710
          %v712 = vmul.f32 %v710, %v711
          %vm713 = vcmp.eq.f32.partialorder %v710, inf
          %v714 = vsel %vm713, %v710, %v712
          %vm715 = vcmp.eq.f32.partialorder %v710, 0.0
          %v716 = vand.u32 %v710, 2147483648
          %v717 = vsel %vm715, %v716, %v714
          %v718 = vsub.f32 %v717, %v410
          %v719 = vmul.f32 %v718, %v443
          %v720 = vadd.f32 %v719, %v701
          %v721 = vmul.f32 %v718, %v446
          %v722 = vadd.f32 %v721, %v703
          %v723 = vmul.f32 %v718, %v449
          %v724 = vadd.f32 %v723, %v705
          %v725 = vmul.f32 %v720, %v720
          %v726 = vmul.f32 %v722, %v722
          %v727 = vadd.f32 %v725, %v726
          %v728 = vmul.f32 %v724, %v724
          %v729 = vadd.f32 %v727, %v728
          %v730 = vrsqrt.pop %v729
          %v731 = vmul.f32 %v729, %v730
          %vm732 = vcmp.eq.f32.partialorder %v729, inf
          %v733 = vsel %vm732, %v729, %v731
          %vm734 = vcmp.eq.f32.partialorder %v729, 0.0
          %v735 = vand.u32 %v729, 2147483648
          %v736 = vsel %vm734, %v735, %v733
          %v737 = vsub.f32 %v736, %v410
          %v738 = vmul.f32 %v737, %v443
          %v739 = vadd.f32 %v738, %v720
          %v740 = vmul.f32 %v737, %v446
          %v741 = vadd.f32 %v740, %v722
          %v742 = vmul.f32 %v737, %v449
          %v743 = vadd.f32 %v742, %v724
          %v744 = vmul.f32 %v739, %v739
          %v745 = vmul.f32 %v741, %v741
          %v746 = vadd.f32 %v744, %v745
          %v747 = vmul.f32 %v743, %v743
          %v748 = vadd.f32 %v746, %v747
          %v749 = vrsqrt.pop %v748
          %v750 = vmul.f32 %v748, %v749
          %vm751 = vcmp.eq.f32.partialorder %v748, inf
          %v752 = vsel %vm751, %v748, %v750
          %vm753 = vcmp.eq.f32.partialorder %v748, 0.0
          %v754 = vand.u32 %v748, 2147483648
          %v755 = vsel %vm753, %v754, %v752
          %v756 = vsub.f32 %v755, %v410
          %v757 = vmul.f32 %v756, %v443
          %v758 = vadd.f32 %v757, %v739
          %v759 = vmul.f32 %v756, %v446
          %v760 = vadd.f32 %v759, %v741
          %v761 = vmul.f32 %v756, %v449
          %v762 = vadd.f32 %v761, %v743
          %v763 = vmul.f32 %v758, %v758
          %v764 = vmul.f32 %v760, %v760
          %v765 = vadd.f32 %v763, %v764
          %v766 = vmul.f32 %v762, %v762
          %v767 = vadd.f32 %v765, %v766
          %v768 = vrsqrt.pop %v767
          %v769 = vmul.f32 %v767, %v768
          %vm770 = vcmp.eq.f32.partialorder %v767, inf
          %v771 = vsel %vm770, %v767, %v769
          %vm772 = vcmp.eq.f32.partialorder %v767, 0.0
          %v773 = vand.u32 %v767, 2147483648
          %v774 = vsel %vm772, %v773, %v771
          %v775 = vsub.f32 %v774, %v410
          %vm776 = vcmp.lt.f32.partialorder %v775, 1e-05
          %v777 = vadd.f32 %v758, %v404
          %v778 = vadd.f32 %v760, %v406
          %v779 = vadd.f32 %v762, %v408
          %v780 = vmul.f32 %v777, %v412
          %v781 = vmul.f32 %v778, %v418
          %v782 = vadd.f32 %v780, %v781
          %v783 = vmul.f32 %v779, %v424
          %v784 = vadd.f32 %v782, %v783
          %v785 = vadd.f32 %v784, %v430
          %v786 = vmul.f32 %v785, 0.5
          %v787 = vtanh.pop %v786
          %v788 = vmul.f32 %v787, 0.5
          %v789 = vadd.f32 %v788, 0.5
          %v790 = vmul.f32 %v777, %v414
          %v791 = vmul.f32 %v778, %v420
          %v792 = vadd.f32 %v790, %v791
          %v793 = vmul.f32 %v779, %v426
          %v794 = vadd.f32 %v792, %v793
          %v795 = vadd.f32 %v794, %v432
          %v796 = vmul.f32 %v795, 0.5
          %v797 = vtanh.pop %v796
          %v798 = vmul.f32 %v797, 0.5
          %v799 = vadd.f32 %v798, 0.5
          %v800 = vmul.f32 %v777, %v416
          %v801 = vmul.f32 %v778, %v422
          %v802 = vadd.f32 %v800, %v801
          %v803 = vmul.f32 %v779, %v428
          %v804 = vadd.f32 %v802, %v803
          %v805 = vadd.f32 %v804, %v434
          %v806 = vmul.f32 %v805, 0.5
          %v807 = vtanh.pop %v806
          %v808 = vmul.f32 %v807, 0.5
          %v809 = vadd.f32 %v808, 0.5
          %v810 = vsel %vm776, %v789, 0.0
          %s811 = scalar_lea.vmem %s399, %s441 [#allocation13]
          %812 = vst [vmem:[%s811] sm:$0xff] %v810
          %v813 = vsel %vm776, %v799, 0.0
          %s814 = scalar_lea.vmem %s399, %s444 [#allocation13]
          %815 = vst [vmem:[%s814] sm:$0xff] %v813
          %v816 = vsel %vm776, %v809, 0.0
          %s817 = scalar_lea.vmem %s399, %s447 [#allocation13]
          %818 = vst [vmem:[%s817] sm:$0xff] %v816
        $region69: #{tpu_custom_call.1} parent=43 // loop_footer
          %s440 = sadd.s32 1, %s436
        $region70: #{tpu_custom_call.1} parent=43 // loop_footer_branch
          %435 = sbr.rel target = $region66
        $region71: #{tpu_custom_call.1} parent=43 // loop_exit
          _
        %s819 = sand.u32 %s173, 1
        %s820 = scalar_lea.sflag [#allocation5], %s819
        %s821 = sand.u32 %s173, 1
        %s822 = smul.addr %s821, 96
        %s823 = scalar_lea.vmem [#allocation13], %s822
        // Predicated region
        $region72: #{tpu_custom_call.1} parent=43 // pred_check
          %p824 = pneg %p183
        $region73: #{tpu_custom_call.1} parent=43 // pred_check_branch
          %826 = sbr.rel (%p824) target = $region75
        $region74: #{tpu_custom_call.1} parent=43 // pred_region
          #allocation19 [shape = 'u32[6]{0}', space=smem, size = 0x18, scoped, tag = 'DMA stride descriptor']
          %s827 = smul.u32 4, %s29
          %s829 = ssub.s32 1536, 1536
          %830 = vsyncadd %s820, %s829
          %s831 = smul.addr %s827, 128
          %s832 = scalar_lea.hbm %s6, %s831
          %s834 = sshll.u32 1, 14
          %s835 = sxor.u32 4294967295, %s834
          %s838 = sshll.u32 7, 18
          %s839 = sxor.u32 4294967295, %s838
          %s840 = sand.u32 0, %s839
          %s842 = sor.u32 %s840, 0
          %s843 = sshll.u32 %s823, 4
          %s844 = int_to_ptr.vmem [resolvable:$true] %s843
          %850 = sst [smem:[#allocation19]] 512
          %s851 = scalar_lea.smem [#allocation19], 1
          %852 = sst [smem:[%s851]] 2048
          %s853 = scalar_lea.smem [#allocation19], 2
          %854 = sst [smem:[%s853]] 4
          %s855 = scalar_lea.smem [#allocation19], 3
          %856 = sst [smem:[%s855]] 128
          %s857 = scalar_lea.smem [#allocation19], 4
          %858 = sst [smem:[%s857]] 128
          %s859 = scalar_lea.smem [#allocation19], 5
          %860 = sst [smem:[%s859]] 8
          %862 = dma.general %s844, 1536, %s832, %s820, 131072, [#allocation19], %s842, 0
        $region75: #{tpu_custom_call.1} parent=43 // pred_fallthru
          _
      $region44: #{tpu_custom_call.1} parent=5 // pred_fallthru
        _
      %p863 = scmp.le.s32.totalorder 2, %s24
      // Predicated region
      $region76: #{tpu_custom_call.1} parent=5 // pred_check
        %p864 = pneg %p863
      $region77: #{tpu_custom_call.1} parent=5 // pred_check_branch
        %866 = sbr.rel (%p864) target = $region79
      $region78: #{tpu_custom_call.1} parent=5 // pred_region
        %s867 = ssub.s32 %s24, 2
        // Predicated region
        $region80: #{tpu_custom_call.1} parent=78 // pred_check
          %p868 = pneg %p189
        $region81: #{tpu_custom_call.1} parent=78 // pred_check_branch
          %870 = sbr.rel (%p868) target = $region83
        $region82: #{tpu_custom_call.1} parent=78 // pred_region
          %s871 = sand.u32 %s174, 1
          %s872 = scalar_lea.sflag [#allocation5], %s871
          %s873 = sand.u32 %s174, 1
          %s874 = smul.addr %s873, 96
          %s875 = scalar_lea.vmem [#allocation13], %s874
          %876 = dma.done %s872, 1536
        $region83: #{tpu_custom_call.1} parent=78 // pred_fallthru
          _
      $region79: #{tpu_custom_call.1} parent=5 // pred_fallthru
        _
    $region6: #{tpu_custom_call.1} parent=1 // loop_footer
      %s28 = sadd.s32 1, %s24
    $region7: #{tpu_custom_call.1} parent=1 // loop_footer_branch
      %23 = sbr.rel target = $region3
    $region8: #{tpu_custom_call.1} parent=1 // loop_exit
      _
    %877 = vsyncpa [#allocation4], 1
    %s878 = scalar_lea.sflag [#allocation4], 1
    %879 = vsyncpa %s878, 1
    %880 = vsyncpa [#allocation8], 1
    %s881 = scalar_lea.sflag [#allocation8], 1
    %882 = vsyncpa %s881, 1
    %883 = vsyncpa [#allocation5], 1
    %s884 = scalar_lea.sflag [#allocation5], 1
    %885 = vsyncpa %s884, 1
    %886 = vsyncpa [#allocation6], 1
    %s887 = scalar_lea.sflag [#allocation6], 1
    %888 = vsyncpa %s887, 1
    %889 = vsyncpa [#allocation11], 1

</llo_original>
